<compile_context>
chip_gen: v5e
topology: v5e:2x2
jax: 0.10.0
libtpu: 0.0.40
codegen_flags: <defaults>
</compile_context>

<pallas_src>
import jax
import jax.numpy as jnp
from jax.experimental import pallas as pl
from jax.experimental.pallas import tpu as pltpu

# Problem sizes implied by the module (Nt*NtRF output features).
Nt = 16
NtRF = 4
D_IN = 256
D_H1 = 128
D_H2 = 256
D_H3 = 128
D_OUT = Nt * NtRF           # 64
BN_EPS = 1e-5
BATCH = 8                   # small demo batch


def _phi_frf_kernel(x_ref,
                    w1_ref, b1_ref, w2_ref, b2_ref,
                    w3_ref, b3_ref, w4_ref, b4_ref,
                    out_ref):
    # x_ref: (TB, 256); w*_ref: (in, out) BN-folded; b*_ref: (1, out) BN-folded.
    h = x_ref[...]
    h = jnp.maximum(
        jnp.dot(h, w1_ref[...], preferred_element_type=jnp.float32) + b1_ref[...], 0.0)
    h = jnp.maximum(
        jnp.dot(h, w2_ref[...], preferred_element_type=jnp.float32) + b2_ref[...], 0.0)
    h = jnp.maximum(
        jnp.dot(h, w3_ref[...], preferred_element_type=jnp.float32) + b3_ref[...], 0.0)
    u = jnp.dot(h, w4_ref[...], preferred_element_type=jnp.float32) + b4_ref[...]
    # SigmPHI: pi * (2*sigmoid(u) - 1)  (exp runs on the EUP)
    out_ref[...] = jnp.pi * (2.0 / (1.0 + jnp.exp(-u)) - 1.0)


def phi_frf_forward(x, folded_params, *, tb=None):
    """x: (B, 256) f32; folded_params: [(W_in_out, b_1_out)] * 4 -> (B, 64) f32."""
    B = x.shape[0]
    if tb is None:
        tb = B if B <= 1024 else 1024      # big batch tile; tiny VMEM footprint either way
    grid = (pl.cdiv(B, tb),)
    (w1, b1), (w2, b2), (w3, b3), (w4, b4) = folded_params

    def full_spec(arr):
        nd = arr.ndim
        return pl.BlockSpec(arr.shape, lambda i, _nd=nd: (0,) * _nd)

    return pl.pallas_call(
        _phi_frf_kernel,
        out_shape=jax.ShapeDtypeStruct((B, D_OUT), jnp.float32),
        grid_spec=pltpu.PrefetchScalarGridSpec(
            num_scalar_prefetch=0,
            grid=grid,
            in_specs=[
                pl.BlockSpec((tb, D_IN), lambda i: (i, 0)),
                full_spec(w1), full_spec(b1),
                full_spec(w2), full_spec(b2),
                full_spec(w3), full_spec(b3),
                full_spec(w4), full_spec(b4),
            ],
            out_specs=pl.BlockSpec((tb, D_OUT), lambda i: (i, 0)),
        ),
        compiler_params=pltpu.CompilerParams(
            dimension_semantics=("parallel",)),
    )(x, w1, b1, w2, b2, w3, b3, w4, b4)


def _init_params(key):
    """PyTorch-layout params per layer: (W(out,in), b, gamma, beta, run_mean, run_var)."""
    dims = [(D_IN, D_H1), (D_H1, D_H2), (D_H2, D_H3), (D_H3, D_OUT)]
    params = []
    for din, dout in dims:
        key, kw, kb, kg, kbe, km, kv = jax.random.split(key, 7)
        w = jax.random.normal(kw, (dout, din), jnp.float32) / jnp.sqrt(din)
        b = 0.1 * jax.random.normal(kb, (dout,), jnp.float32)
        gamma = 1.0 + 0.1 * jax.random.normal(kg, (dout,), jnp.float32)
        beta = 0.1 * jax.random.normal(kbe, (dout,), jnp.float32)
        mean = 0.1 * jax.random.normal(km, (dout,), jnp.float32)
        var = jax.random.uniform(kv, (dout,), jnp.float32, minval=0.5, maxval=1.5)
        params.append((w, b, gamma, beta, mean, var))
    return params


def _fold_bn(params):
    """Fold eval-mode BatchNorm into the Linear weights/biases (exact)."""
    folded = []
    for (w, b, gamma, beta, mean, var) in params:
        s = gamma / jnp.sqrt(var + BN_EPS)               # (out,)
        wf = (w.T * s[None, :]).astype(jnp.float32)      # (in, out)
        bf = ((b - mean) * s + beta).astype(jnp.float32).reshape(1, -1)
        folded.append((wf, bf))
    return folded


def _phi_frf_ref(x, params):
    """Pure-JAX reference: Linear -> BatchNorm(eval) -> ReLU (x3) -> Linear -> BN -> SigmPHI."""
    h = x
    for idx, (w, b, gamma, beta, mean, var) in enumerate(params):
        z = h @ w.T + b
        z = gamma * (z - mean) / jnp.sqrt(var + BN_EPS) + beta
        if idx < 3:
            z = jnp.maximum(z, 0.0)
        h = z
    return jnp.pi * (2.0 / (1.0 + jnp.exp(-h)) - 1.0)


if __name__ == "__main__":
    key = jax.random.PRNGKey(0)
    kx, kp = jax.random.split(key)
    x = jax.random.normal(kx, (BATCH, D_IN), dtype=jnp.float32)
    params = _init_params(kp)
    folded = _fold_bn(params)

    out = phi_frf_forward(x, folded)
    out = jax.block_until_ready(out)

    ref = _phi_frf_ref(x, params)
    assert out.shape == (BATCH, D_OUT)
    assert jnp.allclose(out, ref, atol=5e-4, rtol=5e-4), "mismatch vs reference"

    print("KERNEL_OK")
</pallas_src>

<mosaic_0001>
module attributes {stable_mosaic.version = 11 : i64} {
  func.func @_phi_frf_kernel(%arg0: i32, %arg1: memref<8x256xf32, #tpu.memory_space<vmem>>, %arg2: memref<256x128xf32, #tpu.memory_space<vmem>>, %arg3: memref<1x128xf32, #tpu.memory_space<vmem>>, %arg4: memref<128x256xf32, #tpu.memory_space<vmem>>, %arg5: memref<1x256xf32, #tpu.memory_space<vmem>>, %arg6: memref<256x128xf32, #tpu.memory_space<vmem>>, %arg7: memref<1x128xf32, #tpu.memory_space<vmem>>, %arg8: memref<128x64xf32, #tpu.memory_space<vmem>>, %arg9: memref<1x64xf32, #tpu.memory_space<vmem>>, %arg10: memref<8x64xf32, #tpu.memory_space<vmem>>) attributes {dimension_semantics = [#tpu.dimension_semantics<parallel>], iteration_bounds = array<i64: 1>, scalar_prefetch = 0 : i64, scratch_operands = 0 : i64, tpu.core_type = #tpu.core_type<tc>, window_params = [{transform_indices = @transform_0, window_bounds = array<i64: 8, 256>}, {pipeline_mode = #tpu.pipeline_mode<synchronous>, transform_indices = @transform_1, window_bounds = array<i64: 256, 128>}, {pipeline_mode = #tpu.pipeline_mode<synchronous>, transform_indices = @transform_2, window_bounds = array<i64: 1, 128>}, {pipeline_mode = #tpu.pipeline_mode<synchronous>, transform_indices = @transform_3, window_bounds = array<i64: 128, 256>}, {pipeline_mode = #tpu.pipeline_mode<synchronous>, transform_indices = @transform_4, window_bounds = array<i64: 1, 256>}, {pipeline_mode = #tpu.pipeline_mode<synchronous>, transform_indices = @transform_5, window_bounds = array<i64: 256, 128>}, {pipeline_mode = #tpu.pipeline_mode<synchronous>, transform_indices = @transform_6, window_bounds = array<i64: 1, 128>}, {pipeline_mode = #tpu.pipeline_mode<synchronous>, transform_indices = @transform_7, window_bounds = array<i64: 128, 64>}, {pipeline_mode = #tpu.pipeline_mode<synchronous>, transform_indices = @transform_8, window_bounds = array<i64: 1, 64>}, {transform_indices = @transform_9, window_bounds = array<i64: 8, 64>}]} {
    %c0 = arith.constant 0 : index
    %c0_0 = arith.constant 0 : index
    %0 = vector.load %arg1[%c0, %c0_0] : memref<8x256xf32, #tpu.memory_space<vmem>>, vector<8x256xf32>
    %c0_1 = arith.constant 0 : index
    %c0_2 = arith.constant 0 : index
    %1 = vector.load %arg2[%c0_1, %c0_2] : memref<256x128xf32, #tpu.memory_space<vmem>>, vector<256x128xf32>
    %cst = arith.constant dense<0.000000e+00> : vector<8x128xf32>
    %2 = tpu.matmul %0, %1, %cst {dimension_numbers = #tpu.dot_dimension_numbers<[1], [0], [0], [1], [0, 0, 1, 1], [], []>} : vector<8x256xf32>, vector<256x128xf32>, vector<8x128xf32> -> vector<8x128xf32>
    %c0_3 = arith.constant 0 : index
    %c0_4 = arith.constant 0 : index
    %3 = vector.load %arg3[%c0_3, %c0_4] : memref<1x128xf32, #tpu.memory_space<vmem>>, vector<1x128xf32>
    %4 = vector.broadcast %3 : vector<1x128xf32> to vector<8x128xf32>
    %5 = arith.addf %2, %4 : vector<8x128xf32>
    %cst_5 = arith.constant 0.000000e+00 : f32
    %6 = vector.broadcast %cst_5 : f32 to vector<8x128xf32>
    %7 = arith.maximumf %5, %6 : vector<8x128xf32>
    %c0_6 = arith.constant 0 : index
    %c0_7 = arith.constant 0 : index
    %8 = vector.load %arg4[%c0_6, %c0_7] : memref<128x256xf32, #tpu.memory_space<vmem>>, vector<128x256xf32>
    %cst_8 = arith.constant dense<0.000000e+00> : vector<8x256xf32>
    %9 = tpu.matmul %7, %8, %cst_8 {dimension_numbers = #tpu.dot_dimension_numbers<[1], [0], [0], [1], [0, 0, 1, 1], [], []>} : vector<8x128xf32>, vector<128x256xf32>, vector<8x256xf32> -> vector<8x256xf32>
    %c0_9 = arith.constant 0 : index
    %c0_10 = arith.constant 0 : index
    %10 = vector.load %arg5[%c0_9, %c0_10] : memref<1x256xf32, #tpu.memory_space<vmem>>, vector<1x256xf32>
    %11 = vector.broadcast %10 : vector<1x256xf32> to vector<8x256xf32>
    %12 = arith.addf %9, %11 : vector<8x256xf32>
    %cst_11 = arith.constant 0.000000e+00 : f32
    %13 = vector.broadcast %cst_11 : f32 to vector<8x256xf32>
    %14 = arith.maximumf %12, %13 : vector<8x256xf32>
    %c0_12 = arith.constant 0 : index
    %c0_13 = arith.constant 0 : index
    %15 = vector.load %arg6[%c0_12, %c0_13] : memref<256x128xf32, #tpu.memory_space<vmem>>, vector<256x128xf32>
    %cst_14 = arith.constant dense<0.000000e+00> : vector<8x128xf32>
    %16 = tpu.matmul %14, %15, %cst_14 {dimension_numbers = #tpu.dot_dimension_numbers<[1], [0], [0], [1], [0, 0, 1, 1], [], []>} : vector<8x256xf32>, vector<256x128xf32>, vector<8x128xf32> -> vector<8x128xf32>
    %c0_15 = arith.constant 0 : index
    %c0_16 = arith.constant 0 : index
    %17 = vector.load %arg7[%c0_15, %c0_16] : memref<1x128xf32, #tpu.memory_space<vmem>>, vector<1x128xf32>
    %18 = vector.broadcast %17 : vector<1x128xf32> to vector<8x128xf32>
    %19 = arith.addf %16, %18 : vector<8x128xf32>
    %cst_17 = arith.constant 0.000000e+00 : f32
    %20 = vector.broadcast %cst_17 : f32 to vector<8x128xf32>
    %21 = arith.maximumf %19, %20 : vector<8x128xf32>
    %c0_18 = arith.constant 0 : index
    %c0_19 = arith.constant 0 : index
    %22 = vector.load %arg8[%c0_18, %c0_19] : memref<128x64xf32, #tpu.memory_space<vmem>>, vector<128x64xf32>
    %cst_20 = arith.constant dense<0.000000e+00> : vector<8x64xf32>
    %23 = tpu.matmul %21, %22, %cst_20 {dimension_numbers = #tpu.dot_dimension_numbers<[1], [0], [0], [1], [0, 0, 1, 1], [], []>} : vector<8x128xf32>, vector<128x64xf32>, vector<8x64xf32> -> vector<8x64xf32>
    %c0_21 = arith.constant 0 : index
    %c0_22 = arith.constant 0 : index
    %24 = vector.load %arg9[%c0_21, %c0_22] : memref<1x64xf32, #tpu.memory_space<vmem>>, vector<1x64xf32>
    %25 = vector.broadcast %24 : vector<1x64xf32> to vector<8x64xf32>
    %26 = arith.addf %23, %25 : vector<8x64xf32>
    %cst_23 = arith.constant 0.000000e+00 : f32
    %27 = vector.broadcast %cst_23 : f32 to vector<8x64xf32>
    %28 = arith.subf %27, %26 : vector<8x64xf32>
    %29 = math.exp %28 : vector<8x64xf32>
    %cst_24 = arith.constant 1.000000e+00 : f32
    %30 = vector.broadcast %cst_24 : f32 to vector<8x64xf32>
    %31 = arith.addf %30, %29 : vector<8x64xf32>
    %cst_25 = arith.constant 2.000000e+00 : f32
    %32 = vector.broadcast %cst_25 : f32 to vector<8x64xf32>
    %33 = arith.divf %32, %31 : vector<8x64xf32>
    %cst_26 = arith.constant 1.000000e+00 : f32
    %34 = vector.broadcast %cst_26 : f32 to vector<8x64xf32>
    %35 = arith.subf %33, %34 : vector<8x64xf32>
    %cst_27 = arith.constant 3.14159274 : f32
    %36 = vector.broadcast %cst_27 : f32 to vector<8x64xf32>
    %37 = arith.mulf %36, %35 : vector<8x64xf32>
    %c0_28 = arith.constant 0 : index
    %c0_29 = arith.constant 0 : index
    %38 = vector.load %arg10[%c0_28, %c0_29] : memref<8x64xf32, #tpu.memory_space<vmem>>, vector<8x64xf32>
    tpu.vector_store %arg10[%c0_28, %c0_29], %37 {strides = array<i32>} : memref<8x64xf32, #tpu.memory_space<vmem>>, vector<8x64xf32>,
    return
  }
  func.func @transform_0(%arg0: i32) -> (i32, i32) {
    %c0_i32 = arith.constant 0 : i32
    %c0_i32_0 = arith.constant 0 : i32
    return %arg0, %c0_i32 : i32, i32
  }
  func.func @transform_1(%arg0: i32) -> (i32, i32) {
    %c0_i32 = arith.constant 0 : i32
    %c0_i32_0 = arith.constant 0 : i32
    %c0_i32_1 = arith.constant 0 : i32
    return %c0_i32, %c0_i32_0 : i32, i32
  }
  func.func @transform_2(%arg0: i32) -> (i32, i32) {
    %c0_i32 = arith.constant 0 : i32
    %c0_i32_0 = arith.constant 0 : i32
    %c0_i32_1 = arith.constant 0 : i32
    return %c0_i32, %c0_i32_0 : i32, i32
  }
  func.func @transform_3(%arg0: i32) -> (i32, i32) {
    %c0_i32 = arith.constant 0 : i32
    %c0_i32_0 = arith.constant 0 : i32
    %c0_i32_1 = arith.constant 0 : i32
    return %c0_i32, %c0_i32_0 : i32, i32
  }
  func.func @transform_4(%arg0: i32) -> (i32, i32) {
    %c0_i32 = arith.constant 0 : i32
    %c0_i32_0 = arith.constant 0 : i32
    %c0_i32_1 = arith.constant 0 : i32
    return %c0_i32, %c0_i32_0 : i32, i32
  }
  func.func @transform_5(%arg0: i32) -> (i32, i32) {
    %c0_i32 = arith.constant 0 : i32
    %c0_i32_0 = arith.constant 0 : i32
    %c0_i32_1 = arith.constant 0 : i32
    return %c0_i32, %c0_i32_0 : i32, i32
  }
  func.func @transform_6(%arg0: i32) -> (i32, i32) {
    %c0_i32 = arith.constant 0 : i32
    %c0_i32_0 = arith.constant 0 : i32
    %c0_i32_1 = arith.constant 0 : i32
    return %c0_i32, %c0_i32_0 : i32, i32
  }
  func.func @transform_7(%arg0: i32) -> (i32, i32) {
    %c0_i32 = arith.constant 0 : i32
    %c0_i32_0 = arith.constant 0 : i32
    %c0_i32_1 = arith.constant 0 : i32
    return %c0_i32, %c0_i32_0 : i32, i32
  }
  func.func @transform_8(%arg0: i32) -> (i32, i32) {
    %c0_i32 = arith.constant 0 : i32
    %c0_i32_0 = arith.constant 0 : i32
    %c0_i32_1 = arith.constant 0 : i32
    return %c0_i32, %c0_i32_0 : i32, i32
  }
  func.func @transform_9(%arg0: i32) -> (i32, i32) {
    %c0_i32 = arith.constant 0 : i32
    %c0_i32_0 = arith.constant 0 : i32
    return %arg0, %c0_i32 : i32, i32
  }
}

</mosaic_0001>

<llo_original>
// kernel: tpu_custom_call.1
$region0: #{tpu_custom_call.1}
  #allocation0 [shape = 'u32[]', space=smem, size = 0x4, offset = 0x4, fixed_abs, tag = 'smem constant byte address 0x4 - core index']
  #allocation1 [shape = 'u32[72,128]{1,0:T(1,128)}', space=vmem, size = 0x9000, scoped, tag = 'internal scratch']
  %s0 = inlined_call_operand.vmem [shape: f32[8,256], index: 0, kind: input, shape index: {}]
  %s1 = inlined_call_operand.hbm [shape: f32[256,128], index: 1, kind: input, shape index: {}]
  %s2 = inlined_call_operand.vmem [shape: f32[1,128], index: 2, kind: input, shape index: {}]
  %s3 = inlined_call_operand.hbm [shape: f32[128,256], index: 3, kind: input, shape index: {}]
  %s4 = inlined_call_operand.vmem [shape: f32[1,256], index: 4, kind: input, shape index: {}]
  %s5 = inlined_call_operand.hbm [shape: f32[256,128], index: 5, kind: input, shape index: {}]
  %s6 = inlined_call_operand.vmem [shape: f32[1,128], index: 6, kind: input, shape index: {}]
  %s7 = inlined_call_operand.vmem [shape: f32[128,64], index: 7, kind: input, shape index: {}]
  %s8 = inlined_call_operand.vmem [shape: f32[1,64], index: 8, kind: input, shape index: {}]
  %s9 = inlined_call_operand.hbm [shape: f32[8,64], index: 9, kind: output, shape index: {}]
  %s10 = sld [smem:[#allocation0]]
  $region58: #{tpu_custom_call.1} parent=0
    _
  %s12 = ssub.s32 1, %s10
  %s13 = scalar_select 0, %s12, %s10
  $region1: #{tpu_custom_call.1} parent=0
    #allocation2 [shape = 'u8[131072]{0}', space=vmem, size = 0x20000, scoped, tag = 'input window, operand 1, single buffered']
    #allocation3 [shape = 's32[1]{0}', space=sflag, size = 0x4, scoped, tag = 'scoped memory for tpu_custom_call.1']
    #allocation4 [shape = 's32[1]{0}', space=sflag, size = 0x4, scoped, tag = 'scoped memory for tpu_custom_call.1']
    #allocation5 [shape = 'u8[131072]{0}', space=vmem, size = 0x20000, scoped, tag = 'input window, operand 3, single buffered']
    #allocation6 [shape = 's32[1]{0}', space=sflag, size = 0x4, scoped, tag = 'scoped memory for tpu_custom_call.1']
    #allocation7 [shape = 'u8[131072]{0}', space=vmem, size = 0x20000, scoped, tag = 'input window, operand 5, single buffered']
    #allocation8 [shape = 'u8[4096]{0}', space=vmem, size = 0x1000, scoped, tag = 'output window, operand 0, single buffered']
    %14 = vsyncpa [#allocation3], 0
    %15 = vsyncpa [#allocation6], 0
    %16 = vsyncpa [#allocation4], 0
    // Predicated region
    $region2: #{tpu_custom_call.1} parent=1 // pred_check
      _
    $region3: #{tpu_custom_call.1} parent=1 // pred_check_branch
      %18 = sbr.rel (0) target = $region5
    $region4: #{tpu_custom_call.1} parent=1 // pred_region
      _
    $region5: #{tpu_custom_call.1} parent=1 // pred_fallthru
      _
    // Predicated region
    $region6: #{tpu_custom_call.1} parent=1 // pred_check
      _
    $region7: #{tpu_custom_call.1} parent=1 // pred_check_branch
      %20 = sbr.rel (0) target = $region9
    $region8: #{tpu_custom_call.1} parent=1 // pred_region
      %22 = vsyncadd [#allocation3], 0
      %s23 = sshll.u32 %s1, 4
      %s24 = int_to_ptr.hbm [resolvable:$true] %s23
      %s25 = sshll.u32 [#allocation2], 4
      %s26 = int_to_ptr.vmem [resolvable:$true] %s25
      %31 = dma.hbm_to_vmem [thread:$0]  %s24, 4096, %s26, [#allocation3], 128, 128, 8
    $region9: #{tpu_custom_call.1} parent=1 // pred_fallthru
      _
    // Predicated region
    $region10: #{tpu_custom_call.1} parent=1 // pred_check
      _
    $region11: #{tpu_custom_call.1} parent=1 // pred_check_branch
      %33 = sbr.rel (0) target = $region13
    $region12: #{tpu_custom_call.1} parent=1 // pred_region
      _
    $region13: #{tpu_custom_call.1} parent=1 // pred_fallthru
      _
    // Predicated region
    $region14: #{tpu_custom_call.1} parent=1 // pred_check
      _
    $region15: #{tpu_custom_call.1} parent=1 // pred_check_branch
      %35 = sbr.rel (0) target = $region17
    $region16: #{tpu_custom_call.1} parent=1 // pred_region
      %37 = vsyncadd [#allocation6], 0
      %s38 = sshll.u32 %s3, 4
      %s39 = int_to_ptr.hbm [resolvable:$true] %s38
      %s40 = sshll.u32 [#allocation5], 4
      %s41 = int_to_ptr.vmem [resolvable:$true] %s40
      %46 = dma.hbm_to_vmem [thread:$0]  %s39, 4096, %s41, [#allocation6], 256, 256, 16
    $region17: #{tpu_custom_call.1} parent=1 // pred_fallthru
      _
    // Predicated region
    $region18: #{tpu_custom_call.1} parent=1 // pred_check
      _
    $region19: #{tpu_custom_call.1} parent=1 // pred_check_branch
      %48 = sbr.rel (0) target = $region21
    $region20: #{tpu_custom_call.1} parent=1 // pred_region
      _
    $region21: #{tpu_custom_call.1} parent=1 // pred_fallthru
      _
    // Predicated region
    $region22: #{tpu_custom_call.1} parent=1 // pred_check
      _
    $region23: #{tpu_custom_call.1} parent=1 // pred_check_branch
      %50 = sbr.rel (0) target = $region25
    $region24: #{tpu_custom_call.1} parent=1 // pred_region
      %52 = vsyncadd [#allocation6], 0
      %s53 = sshll.u32 %s5, 4
      %s54 = int_to_ptr.hbm [resolvable:$true] %s53
      %s55 = sshll.u32 [#allocation7], 4
      %s56 = int_to_ptr.vmem [resolvable:$true] %s55
      %61 = dma.hbm_to_vmem [thread:$0]  %s54, 4096, %s56, [#allocation6], 128, 128, 8
    $region25: #{tpu_custom_call.1} parent=1 // pred_fallthru
      _
    // Predicated region
    $region26: #{tpu_custom_call.1} parent=1 // pred_check
      _
    $region27: #{tpu_custom_call.1} parent=1 // pred_check_branch
      %63 = sbr.rel (0) target = $region29
    $region28: #{tpu_custom_call.1} parent=1 // pred_region
      _
    $region29: #{tpu_custom_call.1} parent=1 // pred_fallthru
      _
    // Predicated region
    $region30: #{tpu_custom_call.1} parent=1 // pred_check
      _
    $region31: #{tpu_custom_call.1} parent=1 // pred_check_branch
      %65 = sbr.rel (0) target = $region33
    $region32: #{tpu_custom_call.1} parent=1 // pred_region
      _
    $region33: #{tpu_custom_call.1} parent=1 // pred_fallthru
      _
    // Predicated region
    $region34: #{tpu_custom_call.1} parent=1 // pred_check
      _
    $region35: #{tpu_custom_call.1} parent=1 // pred_check_branch
      %67 = sbr.rel (0) target = $region37
    $region36: #{tpu_custom_call.1} parent=1 // pred_region
      _
    $region37: #{tpu_custom_call.1} parent=1 // pred_fallthru
      _
    // Predicated region
    $region38: #{tpu_custom_call.1} parent=1 // pred_check
      _
    $region39: #{tpu_custom_call.1} parent=1 // pred_check_branch
      %69 = sbr.rel (0) target = $region41
    $region40: #{tpu_custom_call.1} parent=1 // pred_region
      %71 = dma.done [#allocation3], 4096
    $region41: #{tpu_custom_call.1} parent=1 // pred_fallthru
      _
    // Predicated region
    $region42: #{tpu_custom_call.1} parent=1 // pred_check
      _
    $region43: #{tpu_custom_call.1} parent=1 // pred_check_branch
      %73 = sbr.rel (0) target = $region45
    $region44: #{tpu_custom_call.1} parent=1 // pred_region
      %75 = dma.done [#allocation6], 4096
    $region45: #{tpu_custom_call.1} parent=1 // pred_fallthru
      _
    // Predicated region
    $region46: #{tpu_custom_call.1} parent=1 // pred_check
      _
    $region47: #{tpu_custom_call.1} parent=1 // pred_check_branch
      %77 = sbr.rel (0) target = $region49
    $region48: #{tpu_custom_call.1} parent=1 // pred_region
      %79 = dma.done [#allocation6], 4096
    $region49: #{tpu_custom_call.1} parent=1 // pred_fallthru
      _
    %v80 = vld [vmem:[%s0] sm:$0xff]
    %v81 = vld [vmem:[%s0 + $0x8] sm:$0xff]
    %v82 = vld [vmem:[#allocation2] sm:$0xff]
    %v83 = vld [vmem:[#allocation2 + $0x8] sm:$0xff]
    %v84 = vld [vmem:[#allocation2 + $0x10] sm:$0xff]
    %v85 = vld [vmem:[#allocation2 + $0x18] sm:$0xff]
    %v86 = vld [vmem:[#allocation2 + $0x20] sm:$0xff]
    %v87 = vld [vmem:[#allocation2 + $0x28] sm:$0xff]
    %v88 = vld [vmem:[#allocation2 + $0x30] sm:$0xff]
    %v89 = vld [vmem:[#allocation2 + $0x38] sm:$0xff]
    %v90 = vld [vmem:[#allocation2 + $0x40] sm:$0xff]
    %v91 = vld [vmem:[#allocation2 + $0x48] sm:$0xff]
    %v92 = vld [vmem:[#allocation2 + $0x50] sm:$0xff]
    %v93 = vld [vmem:[#allocation2 + $0x58] sm:$0xff]
    %v94 = vld [vmem:[#allocation2 + $0x60] sm:$0xff]
    %v95 = vld [vmem:[#allocation2 + $0x68] sm:$0xff]
    %v96 = vld [vmem:[#allocation2 + $0x70] sm:$0xff]
    %v97 = vld [vmem:[#allocation2 + $0x78] sm:$0xff]
    %v98 = vld [vmem:[#allocation2 + $0x80] sm:$0xff]
    %v99 = vld [vmem:[#allocation2 + $0x88] sm:$0xff]
    %v100 = vld [vmem:[#allocation2 + $0x90] sm:$0xff]
    %v101 = vld [vmem:[#allocation2 + $0x98] sm:$0xff]
    %v102 = vld [vmem:[#allocation2 + $0xa0] sm:$0xff]
    %v103 = vld [vmem:[#allocation2 + $0xa8] sm:$0xff]
    %v104 = vld [vmem:[#allocation2 + $0xb0] sm:$0xff]
    %v105 = vld [vmem:[#allocation2 + $0xb8] sm:$0xff]
    %v106 = vld [vmem:[#allocation2 + $0xc0] sm:$0xff]
    %v107 = vld [vmem:[#allocation2 + $0xc8] sm:$0xff]
    %v108 = vld [vmem:[#allocation2 + $0xd0] sm:$0xff]
    %v109 = vld [vmem:[#allocation2 + $0xd8] sm:$0xff]
    %v110 = vld [vmem:[#allocation2 + $0xe0] sm:$0xff]
    %v111 = vld [vmem:[#allocation2 + $0xe8] sm:$0xff]
    %v112 = vld [vmem:[#allocation2 + $0xf0] sm:$0xff]
    %v113 = vld [vmem:[#allocation2 + $0xf8] sm:$0xff]
    %v114 = vld [vmem:[%s2] sm:$0x1]
    %v116 = vperm.slane %v114, 0
    %118 = vmatpush.msra.mxu0 %v97
    %119 = vmatpush.msra.mxu0 %v96
    %120 = vmatpush.msra.mxu0 %v95
    %121 = vmatpush.msra.mxu0 %v94
    %122 = vmatpush.msra.mxu0 %v93
    %123 = vmatpush.msra.mxu0 %v92
    %124 = vmatpush.msra.mxu0 %v91
    %125 = vmatpush.msra.mxu0 %v90
    %126 = vmatpush.msra.mxu0 %v89
    %127 = vmatpush.msra.mxu0 %v88
    %128 = vmatpush.msra.mxu0 %v87
    %129 = vmatpush.msra.mxu0 %v86
    %130 = vmatpush.msra.mxu0 %v85
    %131 = vmatpush.msra.mxu0 %v84
    %132 = vmatpush.msra.mxu0 %v83
    %133 = vmatpush.msra.mxu0 %v82
    %134 = vmatmul.f32.gmra.mxu0 %v80
    %v135 = vpop.f32.mrf.mxu0
    %v136 = vadd.f32 %v116, %v135
    %137 = vdwg.mxu0
    %138 = vmatpush.msra.mxu0 %v113
    %139 = vmatpush.msra.mxu0 %v112
    %140 = vmatpush.msra.mxu0 %v111
    %141 = vmatpush.msra.mxu0 %v110
    %142 = vmatpush.msra.mxu0 %v109
    %143 = vmatpush.msra.mxu0 %v108
    %144 = vmatpush.msra.mxu0 %v107
    %145 = vmatpush.msra.mxu0 %v106
    %146 = vmatpush.msra.mxu0 %v105
    %147 = vmatpush.msra.mxu0 %v104
    %148 = vmatpush.msra.mxu0 %v103
    %149 = vmatpush.msra.mxu0 %v102
    %150 = vmatpush.msra.mxu0 %v101
    %151 = vmatpush.msra.mxu0 %v100
    %152 = vmatpush.msra.mxu0 %v99
    %153 = vmatpush.msra.mxu0 %v98
    %154 = vmatmul.f32.gmra.mxu0 %v81
    %v155 = vpop.f32.mrf.mxu0
    %v156 = vadd.f32 %v136, %v155
    %157 = vdwg.mxu0
    %v158 = vmax.f32 %v156, 0.0
    %v159 = vld [vmem:[#allocation5] sm:$0xff]
    %v160 = vld [vmem:[#allocation5 + $0x8] sm:$0xff]
    %v161 = vld [vmem:[#allocation5 + $0x10] sm:$0xff]
    %v162 = vld [vmem:[#allocation5 + $0x18] sm:$0xff]
    %v163 = vld [vmem:[#allocation5 + $0x20] sm:$0xff]
    %v164 = vld [vmem:[#allocation5 + $0x28] sm:$0xff]
    %v165 = vld [vmem:[#allocation5 + $0x30] sm:$0xff]
    %v166 = vld [vmem:[#allocation5 + $0x38] sm:$0xff]
    %v167 = vld [vmem:[#allocation5 + $0x40] sm:$0xff]
    %v168 = vld [vmem:[#allocation5 + $0x48] sm:$0xff]
    %v169 = vld [vmem:[#allocation5 + $0x50] sm:$0xff]
    %v170 = vld [vmem:[#allocation5 + $0x58] sm:$0xff]
    %v171 = vld [vmem:[#allocation5 + $0x60] sm:$0xff]
    %v172 = vld [vmem:[#allocation5 + $0x68] sm:$0xff]
    %v173 = vld [vmem:[#allocation5 + $0x70] sm:$0xff]
    %v174 = vld [vmem:[#allocation5 + $0x78] sm:$0xff]
    %v175 = vld [vmem:[#allocation5 + $0x80] sm:$0xff]
    %v176 = vld [vmem:[#allocation5 + $0x88] sm:$0xff]
    %v177 = vld [vmem:[#allocation5 + $0x90] sm:$0xff]
    %v178 = vld [vmem:[#allocation5 + $0x98] sm:$0xff]
    %v179 = vld [vmem:[#allocation5 + $0xa0] sm:$0xff]
    %v180 = vld [vmem:[#allocation5 + $0xa8] sm:$0xff]
    %v181 = vld [vmem:[#allocation5 + $0xb0] sm:$0xff]
    %v182 = vld [vmem:[#allocation5 + $0xb8] sm:$0xff]
    %v183 = vld [vmem:[#allocation5 + $0xc0] sm:$0xff]
    %v184 = vld [vmem:[#allocation5 + $0xc8] sm:$0xff]
    %v185 = vld [vmem:[#allocation5 + $0xd0] sm:$0xff]
    %v186 = vld [vmem:[#allocation5 + $0xd8] sm:$0xff]
    %v187 = vld [vmem:[#allocation5 + $0xe0] sm:$0xff]
    %v188 = vld [vmem:[#allocation5 + $0xe8] sm:$0xff]
    %v189 = vld [vmem:[#allocation5 + $0xf0] sm:$0xff]
    %v190 = vld [vmem:[#allocation5 + $0xf8] sm:$0xff]
    %v191 = vld [vmem:[%s4] sm:$0x3]
    %v193 = vperm.slane %v191, 0
    %v194 = vperm.slane %v191, 1
    %197 = vmatpush.msra.mxu0 %v189
    %198 = vmatpush.msra.mxu0 %v187
    %199 = vmatpush.msra.mxu0 %v185
    %200 = vmatpush.msra.mxu0 %v183
    %201 = vmatpush.msra.mxu0 %v181
    %202 = vmatpush.msra.mxu0 %v179
    %203 = vmatpush.msra.mxu0 %v177
    %204 = vmatpush.msra.mxu0 %v175
    %205 = vmatpush.msra.mxu0 %v173
    %206 = vmatpush.msra.mxu0 %v171
    %207 = vmatpush.msra.mxu0 %v169
    %208 = vmatpush.msra.mxu0 %v167
    %209 = vmatpush.msra.mxu0 %v165
    %210 = vmatpush.msra.mxu0 %v163
    %211 = vmatpush.msra.mxu0 %v161
    %212 = vmatpush.msra.mxu0 %v159
    %213 = vmatmul.f32.gmra.mxu0 %v158
    %v214 = vpop.f32.mrf.mxu0
    %v215 = vadd.f32 %v193, %v214
    %216 = vdwg.mxu0
    %217 = vmatpush.msra.mxu0 %v190
    %218 = vmatpush.msra.mxu0 %v188
    %219 = vmatpush.msra.mxu0 %v186
    %220 = vmatpush.msra.mxu0 %v184
    %221 = vmatpush.msra.mxu0 %v182
    %222 = vmatpush.msra.mxu0 %v180
    %223 = vmatpush.msra.mxu0 %v178
    %224 = vmatpush.msra.mxu0 %v176
    %225 = vmatpush.msra.mxu0 %v174
    %226 = vmatpush.msra.mxu0 %v172
    %227 = vmatpush.msra.mxu0 %v170
    %228 = vmatpush.msra.mxu0 %v168
    %229 = vmatpush.msra.mxu0 %v166
    %230 = vmatpush.msra.mxu0 %v164
    %231 = vmatpush.msra.mxu0 %v162
    %232 = vmatpush.msra.mxu0 %v160
    %233 = vmatmul.f32.gmra.mxu0 %v158
    %v234 = vpop.f32.mrf.mxu0
    %v235 = vadd.f32 %v194, %v234
    %236 = vdwg.mxu0
    %v237 = vmax.f32 %v215, 0.0
    %v238 = vmax.f32 %v235, 0.0
    %v239 = vld [vmem:[#allocation7] sm:$0xff]
    %v240 = vld [vmem:[#allocation7 + $0x8] sm:$0xff]
    %v241 = vld [vmem:[#allocation7 + $0x10] sm:$0xff]
    %v242 = vld [vmem:[#allocation7 + $0x18] sm:$0xff]
    %v243 = vld [vmem:[#allocation7 + $0x20] sm:$0xff]
    %v244 = vld [vmem:[#allocation7 + $0x28] sm:$0xff]
    %v245 = vld [vmem:[#allocation7 + $0x30] sm:$0xff]
    %v246 = vld [vmem:[#allocation7 + $0x38] sm:$0xff]
    %v247 = vld [vmem:[#allocation7 + $0x40] sm:$0xff]
    %v248 = vld [vmem:[#allocation7 + $0x48] sm:$0xff]
    %v249 = vld [vmem:[#allocation7 + $0x50] sm:$0xff]
    %v250 = vld [vmem:[#allocation7 + $0x58] sm:$0xff]
    %v251 = vld [vmem:[#allocation7 + $0x60] sm:$0xff]
    %v252 = vld [vmem:[#allocation7 + $0x68] sm:$0xff]
    %v253 = vld [vmem:[#allocation7 + $0x70] sm:$0xff]
    %v254 = vld [vmem:[#allocation7 + $0x78] sm:$0xff]
    %v255 = vld [vmem:[#allocation7 + $0x80] sm:$0xff]
    %v256 = vld [vmem:[#allocation7 + $0x88] sm:$0xff]
    %v257 = vld [vmem:[#allocation7 + $0x90] sm:$0xff]
    %v258 = vld [vmem:[#allocation7 + $0x98] sm:$0xff]
    %v259 = vld [vmem:[#allocation7 + $0xa0] sm:$0xff]
    %v260 = vld [vmem:[#allocation7 + $0xa8] sm:$0xff]
    %v261 = vld [vmem:[#allocation7 + $0xb0] sm:$0xff]
    %v262 = vld [vmem:[#allocation7 + $0xb8] sm:$0xff]
    %v263 = vld [vmem:[#allocation7 + $0xc0] sm:$0xff]
    %v264 = vld [vmem:[#allocation7 + $0xc8] sm:$0xff]
    %v265 = vld [vmem:[#allocation7 + $0xd0] sm:$0xff]
    %v266 = vld [vmem:[#allocation7 + $0xd8] sm:$0xff]
    %v267 = vld [vmem:[#allocation7 + $0xe0] sm:$0xff]
    %v268 = vld [vmem:[#allocation7 + $0xe8] sm:$0xff]
    %v269 = vld [vmem:[#allocation7 + $0xf0] sm:$0xff]
    %v270 = vld [vmem:[#allocation7 + $0xf8] sm:$0xff]
    %v271 = vld [vmem:[%s6] sm:$0x1]
    %v273 = vperm.slane %v271, 0
    %275 = vmatpush.msra.mxu0 %v254
    %276 = vmatpush.msra.mxu0 %v253
    %277 = vmatpush.msra.mxu0 %v252
    %278 = vmatpush.msra.mxu0 %v251
    %279 = vmatpush.msra.mxu0 %v250
    %280 = vmatpush.msra.mxu0 %v249
    %281 = vmatpush.msra.mxu0 %v248
    %282 = vmatpush.msra.mxu0 %v247
    %283 = vmatpush.msra.mxu0 %v246
    %284 = vmatpush.msra.mxu0 %v245
    %285 = vmatpush.msra.mxu0 %v244
    %286 = vmatpush.msra.mxu0 %v243
    %287 = vmatpush.msra.mxu0 %v242
    %288 = vmatpush.msra.mxu0 %v241
    %289 = vmatpush.msra.mxu0 %v240
    %290 = vmatpush.msra.mxu0 %v239
    %291 = vmatmul.f32.gmra.mxu0 %v237
    %v292 = vpop.f32.mrf.mxu0
    %v293 = vadd.f32 %v273, %v292
    %294 = vdwg.mxu0
    %295 = vmatpush.msra.mxu0 %v270
    %296 = vmatpush.msra.mxu0 %v269
    %297 = vmatpush.msra.mxu0 %v268
    %298 = vmatpush.msra.mxu0 %v267
    %299 = vmatpush.msra.mxu0 %v266
    %300 = vmatpush.msra.mxu0 %v265
    %301 = vmatpush.msra.mxu0 %v264
    %302 = vmatpush.msra.mxu0 %v263
    %303 = vmatpush.msra.mxu0 %v262
    %304 = vmatpush.msra.mxu0 %v261
    %305 = vmatpush.msra.mxu0 %v260
    %306 = vmatpush.msra.mxu0 %v259
    %307 = vmatpush.msra.mxu0 %v258
    %308 = vmatpush.msra.mxu0 %v257
    %309 = vmatpush.msra.mxu0 %v256
    %310 = vmatpush.msra.mxu0 %v255
    %311 = vmatmul.f32.gmra.mxu0 %v238
    %v312 = vpop.f32.mrf.mxu0
    %v313 = vadd.f32 %v293, %v312
    %314 = vdwg.mxu0
    %v315 = vmax.f32 %v313, 0.0
    %v316 = vld [vmem:[%s7] sm:$0xff]
    %v317 = vld [vmem:[%s7 + $0x8] sm:$0xff]
    %v318 = vld [vmem:[%s7 + $0x10] sm:$0xff]
    %v319 = vld [vmem:[%s7 + $0x18] sm:$0xff]
    %v320 = vld [vmem:[%s7 + $0x20] sm:$0xff]
    %v321 = vld [vmem:[%s7 + $0x28] sm:$0xff]
    %v322 = vld [vmem:[%s7 + $0x30] sm:$0xff]
    %v323 = vld [vmem:[%s7 + $0x38] sm:$0xff]
    %v324 = vld [vmem:[%s7 + $0x40] sm:$0xff]
    %v325 = vld [vmem:[%s7 + $0x48] sm:$0xff]
    %v326 = vld [vmem:[%s7 + $0x50] sm:$0xff]
    %v327 = vld [vmem:[%s7 + $0x58] sm:$0xff]
    %v328 = vld [vmem:[%s7 + $0x60] sm:$0xff]
    %v329 = vld [vmem:[%s7 + $0x68] sm:$0xff]
    %v330 = vld [vmem:[%s7 + $0x70] sm:$0xff]
    %v331 = vld [vmem:[%s7 + $0x78] sm:$0xff]
    %v332 = vld [vmem:[%s8] sm:$0x1]
    %v334 = vperm.slane %v332, 0
    %336 = vmatpush.msra.mxu0 %v331
    %337 = vmatpush.msra.mxu0 %v330
    %338 = vmatpush.msra.mxu0 %v329
    %339 = vmatpush.msra.mxu0 %v328
    %340 = vmatpush.msra.mxu0 %v327
    %341 = vmatpush.msra.mxu0 %v326
    %342 = vmatpush.msra.mxu0 %v325
    %343 = vmatpush.msra.mxu0 %v324
    %344 = vmatpush.msra.mxu0 %v323
    %345 = vmatpush.msra.mxu0 %v322
    %346 = vmatpush.msra.mxu0 %v321
    %347 = vmatpush.msra.mxu0 %v320
    %348 = vmatpush.msra.mxu0 %v319
    %349 = vmatpush.msra.mxu0 %v318
    %350 = vmatpush.msra.mxu0 %v317
    %351 = vmatpush.msra.mxu0 %v316
    %352 = vmatmul.f32.gmra.mxu0 %v315
    %v353 = vpop.f32.mrf.mxu0
    %v354 = vadd.f32 %v334, %v353
    %355 = vdwg.mxu0
    %v356 = vsub.f32 0.0, %v354
    %v357 = vmul.f32 %v356, 1.442695
    %v358 = vpow.pop %v357
    %v359 = vadd.f32 %v358, 1.0
    %v360 = vrcp.pop %v359
    %v361 = vmul.f32 %v359, %v360
    %v362 = vsub.f32 1.0, %v361
    %v363 = vmul.f32 %v360, %v362
    %v364 = vadd.f32 %v360, %v363
    %vm365 = vweird.f32 %v359
    %vm366 = vweird.f32 %v360
    %vm367 = vmor %vm365, %vm366
    %v368 = vsel %vm367, %v360, %v364
    %v369 = vand.u32 2147483647, %v359
    %vm370 = vcmp.eq.f32.partialorder %v369, 8.507059e+37
    %v371 = vand.u32 %v359, 2147483648
    %v372 = vor.u32 1.1754944e-38, %v371
    %v373 = vsel %vm370, %v372, %v368
    %v374 = vmul.f32 2.0, %v373
    %v375 = vsub.f32 %v374, 1.0
    %v376 = vmul.f32 %v375, 3.1415927
    %vm377 = vcmask 523264
    %378 = vst.msk [vmem:[#allocation8] sm:$0xff] %vm377, %v376
    // Predicated region
    $region50: #{tpu_custom_call.1} parent=1 // pred_check
      _
    $region51: #{tpu_custom_call.1} parent=1 // pred_check_branch
      %380 = sbr.rel (0) target = $region53
    $region52: #{tpu_custom_call.1} parent=1 // pred_region
      %382 = vsyncadd [#allocation4], 0
      %s384 = sshll.u32 [#allocation8], 4
      %s385 = int_to_ptr.vmem [resolvable:$true] %s384
      %s386 = sshll.u32 %s9, 4
      %s387 = int_to_ptr.hbm [resolvable:$true] %s386
      %389 = dma.vmem_to_hbm [thread:$0]  %s385, 128, %s387, [#allocation4]
    $region53: #{tpu_custom_call.1} parent=1 // pred_fallthru
      _
    // Predicated region
    $region54: #{tpu_custom_call.1} parent=1 // pred_check
      _
    $region55: #{tpu_custom_call.1} parent=1 // pred_check_branch
      %391 = sbr.rel (0) target = $region57
    $region56: #{tpu_custom_call.1} parent=1 // pred_region
      %393 = dma.done [#allocation4], 128
    $region57: #{tpu_custom_call.1} parent=1 // pred_fallthru
      _
    %394 = vsyncpa [#allocation3], 1
    %395 = vsyncpa [#allocation6], 1
    %396 = vsyncpa [#allocation4], 1

</llo_original>
